<compile_context>
chip_gen: v7x
topology: tpu7x:2x2x1
jax: 0.10.0
libtpu: 0.0.40
codegen_flags: <defaults>
</compile_context>

<pallas_src>
import jax
import jax.numpy as jnp
from jax.experimental import pallas as pl
from jax.experimental.pallas import tpu as pltpu

LANE = 128        # vreg lane width
ROW_ALIGN = 16    # bf16 packs 16 rows per vreg -> align batch tiles to 16


def _round_up(n, m):
    return ((n + m - 1) // m) * m


def _hw_defaults():
    """Pick tile / VMEM-limit defaults from the physical VMEM size."""
    vmem_cap = 64 * 2**20  # conservative default if detection fails
    try:
        vmem_cap = int(pltpu.get_tpu_info().vmem_capacity_bytes)
    except Exception:
        pass
    if vmem_cap >= 128 * 2**20:
        # v5e / v6e: 128 MiB physical VMEM, single TensorCore.
        return {"max_tile_b": 512, "vmem_limit": 100 * 2**20, "min_grid": 1}
    # v7x class: 64 MiB VMEM per TensorCore, 2 TensorCores -> want >=2 grid steps.
    return {"max_tile_b": 256, "vmem_limit": 48 * 2**20, "min_grid": 2}


def tower_kernel(x_ref, w1_ref, b1_ref, w2_ref, b2_ref, o_ref):
    # Cast x to bf16 in-kernel (VPU op, hidden under the MXU work).
    x = x_ref[...].astype(jnp.bfloat16)
    # fc1: (tile_b, in) @ (in, hid_p), f32 accumulation on the MXU.
    h = jnp.dot(x, w1_ref[...], preferred_element_type=jnp.float32)
    h = jnp.maximum(h + b1_ref[...], 0.0)          # bias + ReLU in f32
    # Dropout(p=0.4): eval/inference mode -> identity.
    # TODO(synk): training-mode dropout via pltpu.prng_seed + prng_random_bits keyed on pl.program_id.
    # fc2: (tile_b, hid_p) @ (hid_p, out_p), bf16 operands, f32 accumulation.
    y = jnp.dot(h.astype(jnp.bfloat16), w2_ref[...],
                preferred_element_type=jnp.float32)
    y = y + b2_ref[...]
    # sigmoid(y) == 0.5 * tanh(0.5*y) + 0.5 : single EUP push, no divide.
    y = 0.5 * jnp.tanh(0.5 * y) + 0.5
    o_ref[...] = y.astype(o_ref.dtype)


def prepare_tower_params(w1, b1, w2, b2):
    """One-time parameter preparation: pad to 128 lanes and cast weights to bf16.

    w1: (in, hidden), b1: (1, hidden) or (hidden,)
    w2: (hidden, out), b2: (1, out) or (out,)
    Padded hidden columns are zero -> pass through ReLU as 0 and hit zero rows
    of w2, so the math is unchanged; padded output columns are sliced off later.
    """
    in_size, hidden = w1.shape
    out_size = w2.shape[1]
    hid_p = _round_up(hidden, LANE)
    out_p = _round_up(out_size, LANE)

    w1_p = jnp.zeros((in_size, hid_p), jnp.bfloat16).at[:, :hidden].set(
        w1.astype(jnp.bfloat16))
    b1_p = jnp.zeros((1, hid_p), jnp.float32).at[:, :hidden].set(
        b1.reshape(1, -1).astype(jnp.float32))
    w2_p = jnp.zeros((hid_p, out_p), jnp.bfloat16).at[:hidden, :out_size].set(
        w2.astype(jnp.bfloat16))
    b2_p = jnp.zeros((1, out_p), jnp.float32).at[:, :out_size].set(
        b2.reshape(1, -1).astype(jnp.float32))
    return {"w1": w1_p, "b1": b1_p, "w2": w2_p, "b2": b2_p,
            "out_size": out_size}


def _run_tower(x_p, w1_p, b1_p, w2_p, b2_p, *, tile_b, out_dtype, vmem_limit,
               single_buffer_weights):
    B_p, in_size = x_p.shape
    hid_p = w1_p.shape[1]
    out_p = w2_p.shape[1]
    grid = (B_p // tile_b,)

    def resident_spec(shape):
        # Constant index_map -> DMA'd once, stays in VMEM for the whole grid.
        if single_buffer_weights:
            return pl.BlockSpec(shape, lambda i: (0, 0),
                                pipeline_mode=pl.Buffered(1))
        return pl.BlockSpec(shape, lambda i: (0, 0))

    in_specs = [
        pl.BlockSpec((tile_b, in_size), lambda i: (i, 0)),   # x streamed in tiles
        resident_spec((in_size, hid_p)),
        resident_spec((1, hid_p)),
        resident_spec((hid_p, out_p)),
        resident_spec((1, out_p)),
    ]

    return pl.pallas_call(
        tower_kernel,
        out_shape=jax.ShapeDtypeStruct((B_p, out_p), out_dtype),
        grid=grid,
        in_specs=in_specs,
        out_specs=pl.BlockSpec((tile_b, out_p), lambda i: (i, 0)),
        compiler_params=pltpu.CompilerParams(
            dimension_semantics=("parallel",),   # lets v7x shard batch over 2 TCs
            vmem_limit_bytes=vmem_limit,
        ),
    )(x_p, w1_p, b1_p, w2_p, b2_p)


def tower_apply(params, x, *, out_dtype=jnp.bfloat16):
    """sigmoid(relu(x @ w1 + b1) @ w2 + b2) with pre-prepared (padded) params.

    x: (B, in) f32. Returns (B, out_size) in out_dtype (bf16 by default).
    """
    B, in_size = x.shape
    assert in_size == params["w1"].shape[0], "input feature size mismatch"

    hw = _hw_defaults()
    # Balanced batch tiling: bound the tail pad to <16 rows and (on v7x) make
    # at least min_grid steps so both TensorCores get work.
    num_tiles = max(hw["min_grid"], pl.cdiv(B, hw["max_tile_b"]))
    tile_b = _round_up(pl.cdiv(B, num_tiles), ROW_ALIGN)
    B_p = _round_up(B, tile_b)
    x_p = x if B_p == B else jnp.zeros((B_p, in_size), x.dtype).at[:B, :].set(x)

    def run(single_buffer):
        return _run_tower(x_p, params["w1"], params["b1"], params["w2"],
                          params["b2"], tile_b=tile_b, out_dtype=out_dtype,
                          vmem_limit=hw["vmem_limit"],
                          single_buffer_weights=single_buffer)

    try:
        out = run(True)            # single-buffered resident weights
    except Exception:
        out = run(False)           # fallback: default (double) buffering

    # Slice padded rows/lanes off. Consumers that can read the padded buffer
    # directly may skip this (padded lanes hold sigmoid(0)=0.5).
    return out[:B, :params["out_size"]]


def init_linear_params(key, in_features, out_features):
    """Deterministic init mimicking nn.Linear (uniform +/- 1/sqrt(fan_in))."""
    kw, kb = jax.random.split(key)
    bound = 1.0 / jnp.sqrt(jnp.float32(in_features))
    # stored as (in_features, out_features) so the kernel computes x @ W
    w = jax.random.uniform(kw, (in_features, out_features),
                           minval=-bound, maxval=bound, dtype=jnp.float32)
    b = jax.random.uniform(kb, (1, out_features),
                           minval=-bound, maxval=bound, dtype=jnp.float32)
    return w, b


if __name__ == "__main__":
    # Small shapes consistent with the module: batch=8, input=32, hidden=64, output=16
    B, input_size, hidden_size, output_size = 8, 32, 64, 16

    key = jax.random.PRNGKey(0)
    kx, k1, k2 = jax.random.split(key, 3)

    x = jax.random.normal(kx, (B, input_size), dtype=jnp.float32)
    w1, b1 = init_linear_params(k1, input_size, hidden_size)
    w2, b2 = init_linear_params(k2, hidden_size, output_size)

    # Parameter padding/cast happens once, outside the per-forward path.
    params = prepare_tower_params(w1, b1, w2, b2)

    out = tower_apply(params, x)
    out = jax.block_until_ready(out)
    assert out.shape == (B, output_size)

    # Reference with matching bf16 operand precision (f32 accumulation).
    xb, w1b, w2b = (a.astype(jnp.bfloat16) for a in (x, w1, w2))
    h_ref = jnp.maximum(
        jnp.dot(xb, w1b, preferred_element_type=jnp.float32) + b1, 0.0)
    ref_bf16 = jax.nn.sigmoid(
        jnp.dot(h_ref.astype(jnp.bfloat16), w2b,
                preferred_element_type=jnp.float32) + b2)
    assert jnp.allclose(out.astype(jnp.float32), ref_bf16, atol=1e-2), \
        "mismatch vs bf16-matched reference"

    # Sanity check against the full-f32 math (bf16 operand/output rounding tolerance).
    ref_f32 = jax.nn.sigmoid(jnp.maximum(x @ w1 + b1, 0.0) @ w2 + b2)
    assert jnp.allclose(out.astype(jnp.float32), ref_f32, atol=3e-2), \
        "mismatch vs f32 reference"

    print("KERNEL_OK")
</pallas_src>

<mosaic_0001>
module attributes {stable_mosaic.version = 11 : i64} {
  func.func @tower_kernel(%arg0: i32, %arg1: memref<16x32xf32, #tpu.memory_space<vmem>>, %arg2: memref<32x128xbf16, #tpu.memory_space<vmem>>, %arg3: memref<1x128xf32, #tpu.memory_space<vmem>>, %arg4: memref<128x128xbf16, #tpu.memory_space<vmem>>, %arg5: memref<1x128xf32, #tpu.memory_space<vmem>>, %arg6: memref<16x128xbf16, #tpu.memory_space<vmem>>) attributes {dimension_semantics = [#tpu.dimension_semantics<parallel>], iteration_bounds = array<i64: 1>, scalar_prefetch = 0 : i64, scratch_operands = 0 : i64, tpu.core_type = #tpu.core_type<tc>, window_params = [{transform_indices = @transform_0, window_bounds = array<i64: 16, 32>}, {pipeline_mode = #tpu.pipeline_mode<synchronous>, transform_indices = @transform_1, window_bounds = array<i64: 32, 128>}, {pipeline_mode = #tpu.pipeline_mode<synchronous>, transform_indices = @transform_2, window_bounds = array<i64: 1, 128>}, {pipeline_mode = #tpu.pipeline_mode<synchronous>, transform_indices = @transform_3, window_bounds = array<i64: 128, 128>}, {pipeline_mode = #tpu.pipeline_mode<synchronous>, transform_indices = @transform_4, window_bounds = array<i64: 1, 128>}, {transform_indices = @transform_5, window_bounds = array<i64: 16, 128>}]} {
    %c0 = arith.constant 0 : index
    %c0_0 = arith.constant 0 : index
    %0 = vector.load %arg1[%c0, %c0_0] : memref<16x32xf32, #tpu.memory_space<vmem>>, vector<16x32xf32>
    %1 = arith.truncf %0 : vector<16x32xf32> to vector<16x32xbf16>
    %c0_1 = arith.constant 0 : index
    %c0_2 = arith.constant 0 : index
    %2 = vector.load %arg2[%c0_1, %c0_2] : memref<32x128xbf16, #tpu.memory_space<vmem>>, vector<32x128xbf16>
    %cst = arith.constant dense<0.000000e+00> : vector<16x128xf32>
    %3 = tpu.matmul %1, %2, %cst {dimension_numbers = #tpu.dot_dimension_numbers<[1], [0], [0], [1], [0, 0, 1, 1], [], []>} : vector<16x32xbf16>, vector<32x128xbf16>, vector<16x128xf32> -> vector<16x128xf32>
    %c0_3 = arith.constant 0 : index
    %c0_4 = arith.constant 0 : index
    %4 = vector.load %arg3[%c0_3, %c0_4] : memref<1x128xf32, #tpu.memory_space<vmem>>, vector<1x128xf32>
    %5 = vector.broadcast %4 : vector<1x128xf32> to vector<16x128xf32>
    %6 = arith.addf %3, %5 : vector<16x128xf32>
    %cst_5 = arith.constant 0.000000e+00 : f32
    %7 = vector.broadcast %cst_5 : f32 to vector<16x128xf32>
    %8 = arith.maximumf %6, %7 : vector<16x128xf32>
    %9 = arith.truncf %8 : vector<16x128xf32> to vector<16x128xbf16>
    %c0_6 = arith.constant 0 : index
    %c0_7 = arith.constant 0 : index
    %10 = vector.load %arg4[%c0_6, %c0_7] : memref<128x128xbf16, #tpu.memory_space<vmem>>, vector<128x128xbf16>
    %cst_8 = arith.constant dense<0.000000e+00> : vector<16x128xf32>
    %11 = tpu.matmul %9, %10, %cst_8 {dimension_numbers = #tpu.dot_dimension_numbers<[1], [0], [0], [1], [0, 0, 1, 1], [], []>} : vector<16x128xbf16>, vector<128x128xbf16>, vector<16x128xf32> -> vector<16x128xf32>
    %c0_9 = arith.constant 0 : index
    %c0_10 = arith.constant 0 : index
    %12 = vector.load %arg5[%c0_9, %c0_10] : memref<1x128xf32, #tpu.memory_space<vmem>>, vector<1x128xf32>
    %13 = vector.broadcast %12 : vector<1x128xf32> to vector<16x128xf32>
    %14 = arith.addf %11, %13 : vector<16x128xf32>
    %cst_11 = arith.constant 5.000000e-01 : f32
    %15 = vector.broadcast %cst_11 : f32 to vector<16x128xf32>
    %16 = arith.mulf %15, %14 : vector<16x128xf32>
    %17 = math.tanh %16 : vector<16x128xf32>
    %cst_12 = arith.constant 5.000000e-01 : f32
    %18 = vector.broadcast %cst_12 : f32 to vector<16x128xf32>
    %19 = arith.mulf %18, %17 : vector<16x128xf32>
    %cst_13 = arith.constant 5.000000e-01 : f32
    %20 = vector.broadcast %cst_13 : f32 to vector<16x128xf32>
    %21 = arith.addf %19, %20 : vector<16x128xf32>
    %22 = arith.truncf %21 : vector<16x128xf32> to vector<16x128xbf16>
    %c0_14 = arith.constant 0 : index
    %c0_15 = arith.constant 0 : index
    %23 = vector.load %arg6[%c0_14, %c0_15] : memref<16x128xbf16, #tpu.memory_space<vmem>>, vector<16x128xbf16>
    tpu.vector_store %arg6[%c0_14, %c0_15], %22 {strides = array<i32>} : memref<16x128xbf16, #tpu.memory_space<vmem>>, vector<16x128xbf16>,
    return
  }
  func.func @transform_0(%arg0: i32) -> (i32, i32) {
    %c0_i32 = arith.constant 0 : i32
    %c0_i32_0 = arith.constant 0 : i32
    return %arg0, %c0_i32 : i32, i32
  }
  func.func @transform_1(%arg0: i32) -> (i32, i32) {
    %c0_i32 = arith.constant 0 : i32
    %c0_i32_0 = arith.constant 0 : i32
    %c0_i32_1 = arith.constant 0 : i32
    return %c0_i32, %c0_i32_0 : i32, i32
  }
  func.func @transform_2(%arg0: i32) -> (i32, i32) {
    %c0_i32 = arith.constant 0 : i32
    %c0_i32_0 = arith.constant 0 : i32
    %c0_i32_1 = arith.constant 0 : i32
    return %c0_i32, %c0_i32_0 : i32, i32
  }
  func.func @transform_3(%arg0: i32) -> (i32, i32) {
    %c0_i32 = arith.constant 0 : i32
    %c0_i32_0 = arith.constant 0 : i32
    %c0_i32_1 = arith.constant 0 : i32
    return %c0_i32, %c0_i32_0 : i32, i32
  }
  func.func @transform_4(%arg0: i32) -> (i32, i32) {
    %c0_i32 = arith.constant 0 : i32
    %c0_i32_0 = arith.constant 0 : i32
    %c0_i32_1 = arith.constant 0 : i32
    return %c0_i32, %c0_i32_0 : i32, i32
  }
  func.func @transform_5(%arg0: i32) -> (i32, i32) {
    %c0_i32 = arith.constant 0 : i32
    %c0_i32_0 = arith.constant 0 : i32
    return %arg0, %c0_i32 : i32, i32
  }
}

module attributes {stable_mosaic.version = 11 : i64} {
  func.func @tower_kernel(%arg0: i32, %arg1: memref<16x32xf32, #tpu.memory_space<vmem>>, %arg2: memref<32x128xbf16, #tpu.memory_space<vmem>>, %arg3: memref<1x128xf32, #tpu.memory_space<vmem>>, %arg4: memref<128x128xbf16, #tpu.memory_space<vmem>>, %arg5: memref<1x128xf32, #tpu.memory_space<vmem>>, %arg6: memref<16x128xbf16, #tpu.memory_space<vmem>>) attributes {dimension_semantics = [#tpu.dimension_semantics<parallel>], iteration_bounds = array<i64: 1>, scalar_prefetch = 0 : i64, scratch_operands = 0 : i64, tpu.core_type = #tpu.core_type<tc>, window_params = [{transform_indices = @transform_0, window_bounds = array<i64: 16, 32>}, {pipeline_mode = #tpu.pipeline_mode<synchronous>, transform_indices = @transform_1, window_bounds = array<i64: 32, 128>}, {pipeline_mode = #tpu.pipeline_mode<synchronous>, transform_indices = @transform_2, window_bounds = array<i64: 1, 128>}, {pipeline_mode = #tpu.pipeline_mode<synchronous>, transform_indices = @transform_3, window_bounds = array<i64: 128, 128>}, {pipeline_mode = #tpu.pipeline_mode<synchronous>, transform_indices = @transform_4, window_bounds = array<i64: 1, 128>}, {transform_indices = @transform_5, window_bounds = array<i64: 16, 128>}]} {
    %c0 = arith.constant 0 : index
    %c0_0 = arith.constant 0 : index
    %0 = vector.load %arg1[%c0, %c0_0] : memref<16x32xf32, #tpu.memory_space<vmem>>, vector<16x32xf32>
    %1 = arith.truncf %0 : vector<16x32xf32> to vector<16x32xbf16>
    %c0_1 = arith.constant 0 : index
    %c0_2 = arith.constant 0 : index
    %2 = vector.load %arg2[%c0_1, %c0_2] : memref<32x128xbf16, #tpu.memory_space<vmem>>, vector<32x128xbf16>
    %cst = arith.constant dense<0.000000e+00> : vector<16x128xf32>
    %3 = tpu.matmul %1, %2, %cst {dimension_numbers = #tpu.dot_dimension_numbers<[1], [0], [0], [1], [0, 0, 1, 1], [], []>} : vector<16x32xbf16>, vector<32x128xbf16>, vector<16x128xf32> -> vector<16x128xf32>
    %c0_3 = arith.constant 0 : index
    %c0_4 = arith.constant 0 : index
    %4 = vector.load %arg3[%c0_3, %c0_4] : memref<1x128xf32, #tpu.memory_space<vmem>>, vector<1x128xf32>
    %5 = vector.broadcast %4 : vector<1x128xf32> to vector<16x128xf32>
    %6 = arith.addf %3, %5 : vector<16x128xf32>
    %cst_5 = arith.constant 0.000000e+00 : f32
    %7 = vector.broadcast %cst_5 : f32 to vector<16x128xf32>
    %8 = arith.maximumf %6, %7 : vector<16x128xf32>
    %9 = arith.truncf %8 : vector<16x128xf32> to vector<16x128xbf16>
    %c0_6 = arith.constant 0 : index
    %c0_7 = arith.constant 0 : index
    %10 = vector.load %arg4[%c0_6, %c0_7] : memref<128x128xbf16, #tpu.memory_space<vmem>>, vector<128x128xbf16>
    %cst_8 = arith.constant dense<0.000000e+00> : vector<16x128xf32>
    %11 = tpu.matmul %9, %10, %cst_8 {dimension_numbers = #tpu.dot_dimension_numbers<[1], [0], [0], [1], [0, 0, 1, 1], [], []>} : vector<16x128xbf16>, vector<128x128xbf16>, vector<16x128xf32> -> vector<16x128xf32>
    %c0_9 = arith.constant 0 : index
    %c0_10 = arith.constant 0 : index
    %12 = vector.load %arg5[%c0_9, %c0_10] : memref<1x128xf32, #tpu.memory_space<vmem>>, vector<1x128xf32>
    %13 = vector.broadcast %12 : vector<1x128xf32> to vector<16x128xf32>
    %14 = arith.addf %11, %13 : vector<16x128xf32>
    %cst_11 = arith.constant 5.000000e-01 : f32
    %15 = vector.broadcast %cst_11 : f32 to vector<16x128xf32>
    %16 = arith.mulf %15, %14 : vector<16x128xf32>
    %17 = math.tanh %16 : vector<16x128xf32>
    %cst_12 = arith.constant 5.000000e-01 : f32
    %18 = vector.broadcast %cst_12 : f32 to vector<16x128xf32>
    %19 = arith.mulf %18, %17 : vector<16x128xf32>
    %cst_13 = arith.constant 5.000000e-01 : f32
    %20 = vector.broadcast %cst_13 : f32 to vector<16x128xf32>
    %21 = arith.addf %19, %20 : vector<16x128xf32>
    %22 = arith.truncf %21 : vector<16x128xf32> to vector<16x128xbf16>
    %c0_14 = arith.constant 0 : index
    %c0_15 = arith.constant 0 : index
    %23 = vector.load %arg6[%c0_14, %c0_15] : memref<16x128xbf16, #tpu.memory_space<vmem>>, vector<16x128xbf16>
    tpu.vector_store %arg6[%c0_14, %c0_15], %22 {strides = array<i32>} : memref<16x128xbf16, #tpu.memory_space<vmem>>, vector<16x128xbf16>,
    return
  }
  func.func @transform_0(%arg0: i32) -> (i32, i32) {
    %c0_i32 = arith.constant 0 : i32
    %c0_i32_0 = arith.constant 0 : i32
    return %arg0, %c0_i32 : i32, i32
  }
  func.func @transform_1(%arg0: i32) -> (i32, i32) {
    %c0_i32 = arith.constant 0 : i32
    %c0_i32_0 = arith.constant 0 : i32
    %c0_i32_1 = arith.constant 0 : i32
    return %c0_i32, %c0_i32_0 : i32, i32
  }
  func.func @transform_2(%arg0: i32) -> (i32, i32) {
    %c0_i32 = arith.constant 0 : i32
    %c0_i32_0 = arith.constant 0 : i32
    %c0_i32_1 = arith.constant 0 : i32
    return %c0_i32, %c0_i32_0 : i32, i32
  }
  func.func @transform_3(%arg0: i32) -> (i32, i32) {
    %c0_i32 = arith.constant 0 : i32
    %c0_i32_0 = arith.constant 0 : i32
    %c0_i32_1 = arith.constant 0 : i32
    return %c0_i32, %c0_i32_0 : i32, i32
  }
  func.func @transform_4(%arg0: i32) -> (i32, i32) {
    %c0_i32 = arith.constant 0 : i32
    %c0_i32_0 = arith.constant 0 : i32
    %c0_i32_1 = arith.constant 0 : i32
    return %c0_i32, %c0_i32_0 : i32, i32
  }
  func.func @transform_5(%arg0: i32) -> (i32, i32) {
    %c0_i32 = arith.constant 0 : i32
    %c0_i32_0 = arith.constant 0 : i32
    return %arg0, %c0_i32 : i32, i32
  }
}

</mosaic_0001>

<llo_original>
// kernel: tpu_custom_call.1
$region0: #{tpu_custom_call.1}
  #allocation0 [shape = 'u32[]', space=smem, size = 0x4, offset = 0x4, fixed_abs, tag = 'smem constant byte address 0x4 - core index']
  #allocation1 [shape = 'u32[144,128]{1,0:T(1,128)}', space=vmem, size = 0x12000, scoped, tag = 'internal scratch']
  %s0 = inlined_call_operand.hbm [shape: f32[16,32], index: 0, kind: input, shape index: {}]
  %s1 = inlined_call_operand.hbm [shape: bf16[32,128], index: 1, kind: input, shape index: {}]
  %s2 = inlined_call_operand.vmem [shape: f32[1,128], index: 2, kind: input, shape index: {}]
  %s3 = inlined_call_operand.hbm [shape: bf16[128,128], index: 3, kind: input, shape index: {}]
  %s4 = inlined_call_operand.vmem [shape: f32[1,128], index: 4, kind: input, shape index: {}]
  %s5 = inlined_call_operand.hbm [shape: bf16[16,128], index: 5, kind: output, shape index: {}]
  %s6 = sld [smem:[#allocation0]]
  $region42: #{tpu_custom_call.1} parent=0
    _
  %s8 = ssub.s32 1, %s6
  %s9 = scalar_select 0, %s8, %s6
  $region1: #{tpu_custom_call.1} parent=0
    #allocation2 [shape = 'u8[8192]{0}', space=vmem, size = 0x2000, scoped, tag = 'input window, operand 0, single buffered']
    #allocation3 [shape = 's32[1]{0}', space=sflag, size = 0x4, scoped, tag = 'scoped memory for tpu_custom_call.1']
    #allocation4 [shape = 's32[1]{0}', space=sflag, size = 0x4, scoped, tag = 'scoped memory for tpu_custom_call.1']
    #allocation5 [shape = 'u8[8192]{0}', space=vmem, size = 0x2000, scoped, tag = 'input window, operand 1, single buffered']
    #allocation6 [shape = 's32[1]{0}', space=sflag, size = 0x4, scoped, tag = 'scoped memory for tpu_custom_call.1']
    #allocation7 [shape = 'u8[32768]{0}', space=vmem, size = 0x8000, scoped, tag = 'input window, operand 3, single buffered']
    #allocation8 [shape = 'u8[4096]{0}', space=vmem, size = 0x1000, scoped, tag = 'output window, operand 0, single buffered']
    %10 = vsyncpa [#allocation3], 0
    %11 = vsyncpa [#allocation6], 0
    %12 = vsyncpa [#allocation4], 0
    // Predicated region
    $region2: #{tpu_custom_call.1} parent=1 // pred_check
      _
    $region3: #{tpu_custom_call.1} parent=1 // pred_check_branch
      %14 = sbr.rel (0) target = $region5
    $region4: #{tpu_custom_call.1} parent=1 // pred_region
      %s16 = ssub.s32 256, 256
      %17 = vsyncadd [#allocation3], %s16
      %s18 = sshll.u32 [#allocation2], 4
      %s19 = int_to_ptr.vmem [resolvable:$true] %s18
      %24 = dma.hbm_to_vmem [thread:$0]  %s0, 256, %s19, [#allocation3], 128, 128, 8
    $region5: #{tpu_custom_call.1} parent=1 // pred_fallthru
      _
    // Predicated region
    $region6: #{tpu_custom_call.1} parent=1 // pred_check
      _
    $region7: #{tpu_custom_call.1} parent=1 // pred_check_branch
      %26 = sbr.rel (0) target = $region9
    $region8: #{tpu_custom_call.1} parent=1 // pred_region
      %s28 = ssub.s32 256, 256
      %29 = vsyncadd [#allocation6], %s28
      %s30 = sshll.u32 [#allocation5], 4
      %s31 = int_to_ptr.vmem [resolvable:$true] %s30
      %36 = dma.hbm_to_vmem [thread:$0]  %s1, 256, %s31, [#allocation6], 64, 64, 4
    $region9: #{tpu_custom_call.1} parent=1 // pred_fallthru
      _
    // Predicated region
    $region10: #{tpu_custom_call.1} parent=1 // pred_check
      _
    $region11: #{tpu_custom_call.1} parent=1 // pred_check_branch
      %38 = sbr.rel (0) target = $region13
    $region12: #{tpu_custom_call.1} parent=1 // pred_region
      _
    $region13: #{tpu_custom_call.1} parent=1 // pred_fallthru
      _
    // Predicated region
    $region14: #{tpu_custom_call.1} parent=1 // pred_check
      _
    $region15: #{tpu_custom_call.1} parent=1 // pred_check_branch
      %40 = sbr.rel (0) target = $region17
    $region16: #{tpu_custom_call.1} parent=1 // pred_region
      %s42 = ssub.s32 1024, 1024
      %43 = vsyncadd [#allocation6], %s42
      %s44 = sshll.u32 [#allocation7], 4
      %s45 = int_to_ptr.vmem [resolvable:$true] %s44
      %50 = dma.hbm_to_vmem [thread:$0]  %s3, 1024, %s45, [#allocation6], 64, 64, 4
    $region17: #{tpu_custom_call.1} parent=1 // pred_fallthru
      _
    // Predicated region
    $region18: #{tpu_custom_call.1} parent=1 // pred_check
      _
    $region19: #{tpu_custom_call.1} parent=1 // pred_check_branch
      %52 = sbr.rel (0) target = $region21
    $region20: #{tpu_custom_call.1} parent=1 // pred_region
      _
    $region21: #{tpu_custom_call.1} parent=1 // pred_fallthru
      _
    // Predicated region
    $region22: #{tpu_custom_call.1} parent=1 // pred_check
      _
    $region23: #{tpu_custom_call.1} parent=1 // pred_check_branch
      %54 = sbr.rel (0) target = $region25
    $region24: #{tpu_custom_call.1} parent=1 // pred_region
      %55 = dma.done [#allocation3], 256
    $region25: #{tpu_custom_call.1} parent=1 // pred_fallthru
      _
    // Predicated region
    $region26: #{tpu_custom_call.1} parent=1 // pred_check
      _
    $region27: #{tpu_custom_call.1} parent=1 // pred_check_branch
      %57 = sbr.rel (0) target = $region29
    $region28: #{tpu_custom_call.1} parent=1 // pred_region
      %58 = dma.done [#allocation6], 256
    $region29: #{tpu_custom_call.1} parent=1 // pred_fallthru
      _
    // Predicated region
    $region30: #{tpu_custom_call.1} parent=1 // pred_check
      _
    $region31: #{tpu_custom_call.1} parent=1 // pred_check_branch
      %60 = sbr.rel (0) target = $region33
    $region32: #{tpu_custom_call.1} parent=1 // pred_region
      %61 = dma.done [#allocation6], 1024
    $region33: #{tpu_custom_call.1} parent=1 // pred_fallthru
      _
    %v63 = vld [vmem:[#allocation2] sm:$0xff]
    %v64 = vld [vmem:[#allocation2 + $0x8] sm:$0xff]
    %v65 = vpack.c.bf16 %v64, %v63
    %v66 = vld [vmem:[#allocation5] sm:$0xf]
    %v67 = vld [vmem:[#allocation5 + $0x4] sm:$0xf]
    %v68 = vld [vmem:[#allocation5 + $0x8] sm:$0xf]
    %v69 = vld [vmem:[#allocation5 + $0xc] sm:$0xf]
    %v70 = vld [vmem:[%s2] sm:$0x1]
    %v72 = vlaneseq
    %v73 = vshrl.u32 %v72, 7
    %v74 = vsub.s32 0, %v73
    %v75 = vrot.slane %v70, %v74
    %v81 = vunpack.c.l.b16 %v66
    %v82 = vunpack.c.l.b16 %v67
    %v83 = vunpack.c.l.b16 %v68
    %v84 = vunpack.c.l.b16 %v69
    %v85 = vpack.c.b16 %v82, %v81
    %v86 = vpack.c.b16 %v84, %v83
    %vm89 = vcmask 261120
    %v91 = vsel %vm89, %v65, 0
    %93 = vmatprep.subr.bf16.mxu0 0
    %94 = vmatpush1.bf16.msra.mxu0 %v85
    %95 = vmatprep.subr.bf16.mxu0 0
    %96 = vmatpush1.bf16.msra.mxu0 %v86
    %97 = vmatprep.subr.bf16.mxu0 0
    %98 = vmatpush1.bf16.msra.mxu0 0
    %99 = vmatprep.subr.bf16.mxu0 0
    %100 = vmatpush1.bf16.msra.mxu0 0
    %101 = vmatprep.subr.bf16.mxu0 0
    %102 = vmatpush1.bf16.msra.mxu0 0
    %103 = vmatprep.subr.bf16.mxu0 0
    %104 = vmatpush1.bf16.msra.mxu0 0
    %105 = vmatprep.subr.bf16.mxu0 0
    %106 = vmatpush1.bf16.msra.mxu0 0
    %107 = vmatprep.subr.bf16.mxu0 0
    %108 = vmatpush1.bf16.msra.mxu0 0
    %109 = vmatprep.subr.bf16.mxu0 0
    %110 = vmatpush1.bf16.msra.mxu0 0
    %111 = vmatprep.subr.bf16.mxu0 0
    %112 = vmatpush1.bf16.msra.mxu0 0
    %113 = vmatprep.subr.bf16.mxu0 0
    %114 = vmatpush1.bf16.msra.mxu0 0
    %115 = vmatprep.subr.bf16.mxu0 0
    %116 = vmatpush1.bf16.msra.mxu0 0
    %117 = vmatprep.subr.bf16.mxu0 0
    %118 = vmatpush1.bf16.msra.mxu0 0
    %119 = vmatprep.subr.bf16.mxu0 0
    %120 = vmatpush1.bf16.msra.mxu0 0
    %121 = vmatprep.subr.bf16.mxu0 0
    %122 = vmatpush1.bf16.msra.mxu0 0
    %123 = vmatprep.subr.bf16.mxu0 0
    %124 = vmatpush1.bf16.msra.mxu0 0
    %125 = vmatprep.mubr.bf16.mxu0 0
    %126 = vmatmul.mubr.bf16.gmra.mrb[0].mxu0 %v91
    %v127 = vpop.f32.mrb[0].mxu0
    %v128 = vadd.f32 %v75, %v127
    %v129 = vpop.f32.mrb[0].mxu0
    %v130 = vpop.f32.mrb[0].mxu0
    %v131 = vadd.f32 %v75, %v130
    %v132 = vpop.f32.mrb[0].mxu0
    %133 = vdwg.mxu0
    %v134 = vmax.f32 %v128, 0.0
    %v135 = vmax.f32 %v131, 0.0
    %v136 = vpack.c.bf16 %v135, %v134
    %v137 = vld [vmem:[#allocation7] sm:$0xf]
    %v138 = vld [vmem:[#allocation7 + $0x4] sm:$0xf]
    %v139 = vld [vmem:[#allocation7 + $0x8] sm:$0xf]
    %v140 = vld [vmem:[#allocation7 + $0xc] sm:$0xf]
    %v141 = vld [vmem:[#allocation7 + $0x10] sm:$0xf]
    %v142 = vld [vmem:[#allocation7 + $0x14] sm:$0xf]
    %v143 = vld [vmem:[#allocation7 + $0x18] sm:$0xf]
    %v144 = vld [vmem:[#allocation7 + $0x1c] sm:$0xf]
    %v145 = vld [vmem:[#allocation7 + $0x20] sm:$0xf]
    %v146 = vld [vmem:[#allocation7 + $0x24] sm:$0xf]
    %v147 = vld [vmem:[#allocation7 + $0x28] sm:$0xf]
    %v148 = vld [vmem:[#allocation7 + $0x2c] sm:$0xf]
    %v149 = vld [vmem:[#allocation7 + $0x30] sm:$0xf]
    %v150 = vld [vmem:[#allocation7 + $0x34] sm:$0xf]
    %v151 = vld [vmem:[#allocation7 + $0x38] sm:$0xf]
    %v152 = vld [vmem:[#allocation7 + $0x3c] sm:$0xf]
    %v153 = vld [vmem:[%s4] sm:$0x1]
    %v155 = vlaneseq
    %v156 = vshrl.u32 %v155, 7
    %v157 = vsub.s32 0, %v156
    %v158 = vrot.slane %v153, %v157
    %v176 = vunpack.c.l.b16 %v137
    %v177 = vunpack.c.l.b16 %v138
    %v178 = vunpack.c.l.b16 %v139
    %v179 = vunpack.c.l.b16 %v140
    %v180 = vunpack.c.l.b16 %v141
    %v181 = vunpack.c.l.b16 %v142
    %v182 = vunpack.c.l.b16 %v143
    %v183 = vunpack.c.l.b16 %v144
    %v184 = vunpack.c.l.b16 %v145
    %v185 = vunpack.c.l.b16 %v146
    %v186 = vunpack.c.l.b16 %v147
    %v187 = vunpack.c.l.b16 %v148
    %v188 = vunpack.c.l.b16 %v149
    %v189 = vunpack.c.l.b16 %v150
    %v190 = vunpack.c.l.b16 %v151
    %v191 = vunpack.c.l.b16 %v152
    %v192 = vpack.c.b16 %v177, %v176
    %v193 = vpack.c.b16 %v179, %v178
    %v194 = vpack.c.b16 %v181, %v180
    %v195 = vpack.c.b16 %v183, %v182
    %v196 = vpack.c.b16 %v185, %v184
    %v197 = vpack.c.b16 %v187, %v186
    %v198 = vpack.c.b16 %v189, %v188
    %v199 = vpack.c.b16 %v191, %v190
    %208 = vmatprep.subr.bf16.mxu0 0
    %209 = vmatpush1.bf16.msra.mxu0 %v192
    %210 = vmatprep.subr.bf16.mxu0 0
    %211 = vmatpush1.bf16.msra.mxu0 %v193
    %212 = vmatprep.subr.bf16.mxu0 0
    %213 = vmatpush1.bf16.msra.mxu0 %v194
    %214 = vmatprep.subr.bf16.mxu0 0
    %215 = vmatpush1.bf16.msra.mxu0 %v195
    %216 = vmatprep.subr.bf16.mxu0 0
    %217 = vmatpush1.bf16.msra.mxu0 %v196
    %218 = vmatprep.subr.bf16.mxu0 0
    %219 = vmatpush1.bf16.msra.mxu0 %v197
    %220 = vmatprep.subr.bf16.mxu0 0
    %221 = vmatpush1.bf16.msra.mxu0 %v198
    %222 = vmatprep.subr.bf16.mxu0 0
    %223 = vmatpush1.bf16.msra.mxu0 %v199
    %224 = vmatprep.subr.bf16.mxu0 0
    %225 = vmatpush1.bf16.msra.mxu0 0
    %226 = vmatprep.subr.bf16.mxu0 0
    %227 = vmatpush1.bf16.msra.mxu0 0
    %228 = vmatprep.subr.bf16.mxu0 0
    %229 = vmatpush1.bf16.msra.mxu0 0
    %230 = vmatprep.subr.bf16.mxu0 0
    %231 = vmatpush1.bf16.msra.mxu0 0
    %232 = vmatprep.subr.bf16.mxu0 0
    %233 = vmatpush1.bf16.msra.mxu0 0
    %234 = vmatprep.subr.bf16.mxu0 0
    %235 = vmatpush1.bf16.msra.mxu0 0
    %236 = vmatprep.subr.bf16.mxu0 0
    %237 = vmatpush1.bf16.msra.mxu0 0
    %238 = vmatprep.subr.bf16.mxu0 0
    %239 = vmatpush1.bf16.msra.mxu0 0
    %240 = vmatprep.mubr.bf16.mxu0 0
    %241 = vmatmul.mubr.bf16.gmra.mrb[0].mxu0 %v136
    %v242 = vpop.f32.mrb[0].mxu0
    %v243 = vadd.f32 %v158, %v242
    %v244 = vpop.f32.mrb[0].mxu0
    %v245 = vpop.f32.mrb[0].mxu0
    %v246 = vadd.f32 %v158, %v245
    %v247 = vpop.f32.mrb[0].mxu0
    %248 = vdwg.mxu0
    %v249 = vmul.f32 %v243, 0.5
    %v250 = vmul.f32 %v246, 0.5
    %v251 = vtanh.pop %v249
    %v252 = vtanh.pop %v250
    %v253 = vmul.f32 %v251, 0.5
    %v254 = vmul.f32 %v252, 0.5
    %v255 = vadd.f32 %v253, 0.5
    %v256 = vadd.f32 %v254, 0.5
    %v257 = vpack.c.bf16 %v256, %v255
    %v259 = vunpack.c.l.b16 %v257
    %v260 = vunpack.c.h.b16 %v257
    %v261 = vpack.c.b16 %v259, %v259
    %v262 = vpack.c.b16 %v260, %v260
    %265 = vst [vmem:[#allocation8] sm:$0xf] %v261
    %266 = vst [vmem:[#allocation8 + $0x4] sm:$0xf] %v262
    // Predicated region
    $region34: #{tpu_custom_call.1} parent=1 // pred_check
      _
    $region35: #{tpu_custom_call.1} parent=1 // pred_check_branch
      %268 = sbr.rel (0) target = $region37
    $region36: #{tpu_custom_call.1} parent=1 // pred_region
      %s270 = ssub.s32 128, 128
      %271 = vsyncadd [#allocation4], %s270
      %s272 = sshll.u32 [#allocation8], 4
      %s273 = int_to_ptr.vmem [resolvable:$true] %s272
      %278 = dma.vmem_to_hbm [thread:$0]  %s273, 128, %s5, [#allocation4], 64, 64, 4
    $region37: #{tpu_custom_call.1} parent=1 // pred_fallthru
      _
    // Predicated region
    $region38: #{tpu_custom_call.1} parent=1 // pred_check
      _
    $region39: #{tpu_custom_call.1} parent=1 // pred_check_branch
      %280 = sbr.rel (0) target = $region41
    $region40: #{tpu_custom_call.1} parent=1 // pred_region
      %281 = dma.done [#allocation4], 128
    $region41: #{tpu_custom_call.1} parent=1 // pred_fallthru
      _
    %282 = vsyncpa [#allocation3], 1
    %283 = vsyncpa [#allocation6], 1
    %284 = vsyncpa [#allocation4], 1

// kernel: tpu_custom_call.1
$region0: #{tpu_custom_call.1}
  #allocation0 [shape = 'u32[]', space=smem, size = 0x4, offset = 0x4, fixed_abs, tag = 'smem constant byte address 0x4 - core index']
  #allocation1 [shape = 'u32[144,128]{1,0:T(1,128)}', space=vmem, size = 0x12000, scoped, tag = 'internal scratch']
  %s0 = inlined_call_operand.hbm [shape: f32[16,32], index: 0, kind: input, shape index: {}]
  %s1 = inlined_call_operand.hbm [shape: bf16[32,128], index: 1, kind: input, shape index: {}]
  %s2 = inlined_call_operand.vmem [shape: f32[1,128], index: 2, kind: input, shape index: {}]
  %s3 = inlined_call_operand.hbm [shape: bf16[128,128], index: 3, kind: input, shape index: {}]
  %s4 = inlined_call_operand.vmem [shape: f32[1,128], index: 4, kind: input, shape index: {}]
  %s5 = inlined_call_operand.hbm [shape: bf16[16,128], index: 5, kind: output, shape index: {}]
  %s6 = sld [smem:[#allocation0]]
  $region42: #{tpu_custom_call.1} parent=0
    _
  %s8 = ssub.s32 1, %s6
  %s9 = scalar_select 0, %s8, %s6
  $region1: #{tpu_custom_call.1} parent=0
    #allocation2 [shape = 'u8[8192]{0}', space=vmem, size = 0x2000, scoped, tag = 'input window, operand 0, single buffered']
    #allocation3 [shape = 's32[1]{0}', space=sflag, size = 0x4, scoped, tag = 'scoped memory for tpu_custom_call.1']
    #allocation4 [shape = 's32[1]{0}', space=sflag, size = 0x4, scoped, tag = 'scoped memory for tpu_custom_call.1']
    #allocation5 [shape = 'u8[8192]{0}', space=vmem, size = 0x2000, scoped, tag = 'input window, operand 1, single buffered']
    #allocation6 [shape = 's32[1]{0}', space=sflag, size = 0x4, scoped, tag = 'scoped memory for tpu_custom_call.1']
    #allocation7 [shape = 'u8[32768]{0}', space=vmem, size = 0x8000, scoped, tag = 'input window, operand 3, single buffered']
    #allocation8 [shape = 'u8[4096]{0}', space=vmem, size = 0x1000, scoped, tag = 'output window, operand 0, single buffered']
    %10 = vsyncpa [#allocation3], 0
    %11 = vsyncpa [#allocation6], 0
    %12 = vsyncpa [#allocation4], 0
    // Predicated region
    $region2: #{tpu_custom_call.1} parent=1 // pred_check
      _
    $region3: #{tpu_custom_call.1} parent=1 // pred_check_branch
      %14 = sbr.rel (0) target = $region5
    $region4: #{tpu_custom_call.1} parent=1 // pred_region
      %s16 = ssub.s32 256, 256
      %17 = vsyncadd [#allocation3], %s16
      %s18 = sshll.u32 [#allocation2], 4
      %s19 = int_to_ptr.vmem [resolvable:$true] %s18
      %24 = dma.hbm_to_vmem [thread:$0]  %s0, 256, %s19, [#allocation3], 128, 128, 8
    $region5: #{tpu_custom_call.1} parent=1 // pred_fallthru
      _
    // Predicated region
    $region6: #{tpu_custom_call.1} parent=1 // pred_check
      _
    $region7: #{tpu_custom_call.1} parent=1 // pred_check_branch
      %26 = sbr.rel (0) target = $region9
    $region8: #{tpu_custom_call.1} parent=1 // pred_region
      %s28 = ssub.s32 256, 256
      %29 = vsyncadd [#allocation6], %s28
      %s30 = sshll.u32 [#allocation5], 4
      %s31 = int_to_ptr.vmem [resolvable:$true] %s30
      %36 = dma.hbm_to_vmem [thread:$0]  %s1, 256, %s31, [#allocation6], 64, 64, 4
    $region9: #{tpu_custom_call.1} parent=1 // pred_fallthru
      _
    // Predicated region
    $region10: #{tpu_custom_call.1} parent=1 // pred_check
      _
    $region11: #{tpu_custom_call.1} parent=1 // pred_check_branch
      %38 = sbr.rel (0) target = $region13
    $region12: #{tpu_custom_call.1} parent=1 // pred_region
      _
    $region13: #{tpu_custom_call.1} parent=1 // pred_fallthru
      _
    // Predicated region
    $region14: #{tpu_custom_call.1} parent=1 // pred_check
      _
    $region15: #{tpu_custom_call.1} parent=1 // pred_check_branch
      %40 = sbr.rel (0) target = $region17
    $region16: #{tpu_custom_call.1} parent=1 // pred_region
      %s42 = ssub.s32 1024, 1024
      %43 = vsyncadd [#allocation6], %s42
      %s44 = sshll.u32 [#allocation7], 4
      %s45 = int_to_ptr.vmem [resolvable:$true] %s44
      %50 = dma.hbm_to_vmem [thread:$0]  %s3, 1024, %s45, [#allocation6], 64, 64, 4
    $region17: #{tpu_custom_call.1} parent=1 // pred_fallthru
      _
    // Predicated region
    $region18: #{tpu_custom_call.1} parent=1 // pred_check
      _
    $region19: #{tpu_custom_call.1} parent=1 // pred_check_branch
      %52 = sbr.rel (0) target = $region21
    $region20: #{tpu_custom_call.1} parent=1 // pred_region
      _
    $region21: #{tpu_custom_call.1} parent=1 // pred_fallthru
      _
    // Predicated region
    $region22: #{tpu_custom_call.1} parent=1 // pred_check
      _
    $region23: #{tpu_custom_call.1} parent=1 // pred_check_branch
      %54 = sbr.rel (0) target = $region25
    $region24: #{tpu_custom_call.1} parent=1 // pred_region
      %55 = dma.done [#allocation3], 256
    $region25: #{tpu_custom_call.1} parent=1 // pred_fallthru
      _
    // Predicated region
    $region26: #{tpu_custom_call.1} parent=1 // pred_check
      _
    $region27: #{tpu_custom_call.1} parent=1 // pred_check_branch
      %57 = sbr.rel (0) target = $region29
    $region28: #{tpu_custom_call.1} parent=1 // pred_region
      %58 = dma.done [#allocation6], 256
    $region29: #{tpu_custom_call.1} parent=1 // pred_fallthru
      _
    // Predicated region
    $region30: #{tpu_custom_call.1} parent=1 // pred_check
      _
    $region31: #{tpu_custom_call.1} parent=1 // pred_check_branch
      %60 = sbr.rel (0) target = $region33
    $region32: #{tpu_custom_call.1} parent=1 // pred_region
      %61 = dma.done [#allocation6], 1024
    $region33: #{tpu_custom_call.1} parent=1 // pred_fallthru
      _
    %v63 = vld [vmem:[#allocation2] sm:$0xff]
    %v64 = vld [vmem:[#allocation2 + $0x8] sm:$0xff]
    %v65 = vpack.c.bf16 %v64, %v63
    %v66 = vld [vmem:[#allocation5] sm:$0xf]
    %v67 = vld [vmem:[#allocation5 + $0x4] sm:$0xf]
    %v68 = vld [vmem:[#allocation5 + $0x8] sm:$0xf]
    %v69 = vld [vmem:[#allocation5 + $0xc] sm:$0xf]
    %v70 = vld [vmem:[%s2] sm:$0x1]
    %v72 = vlaneseq
    %v73 = vshrl.u32 %v72, 7
    %v74 = vsub.s32 0, %v73
    %v75 = vrot.slane %v70, %v74
    %v81 = vunpack.c.l.b16 %v66
    %v82 = vunpack.c.l.b16 %v67
    %v83 = vunpack.c.l.b16 %v68
    %v84 = vunpack.c.l.b16 %v69
    %v85 = vpack.c.b16 %v82, %v81
    %v86 = vpack.c.b16 %v84, %v83
    %vm89 = vcmask 261120
    %v91 = vsel %vm89, %v65, 0
    %93 = vmatprep.subr.bf16.mxu0 0
    %94 = vmatpush1.bf16.msra.mxu0 %v85
    %95 = vmatprep.subr.bf16.mxu0 0
    %96 = vmatpush1.bf16.msra.mxu0 %v86
    %97 = vmatprep.subr.bf16.mxu0 0
    %98 = vmatpush1.bf16.msra.mxu0 0
    %99 = vmatprep.subr.bf16.mxu0 0
    %100 = vmatpush1.bf16.msra.mxu0 0
    %101 = vmatprep.subr.bf16.mxu0 0
    %102 = vmatpush1.bf16.msra.mxu0 0
    %103 = vmatprep.subr.bf16.mxu0 0
    %104 = vmatpush1.bf16.msra.mxu0 0
    %105 = vmatprep.subr.bf16.mxu0 0
    %106 = vmatpush1.bf16.msra.mxu0 0
    %107 = vmatprep.subr.bf16.mxu0 0
    %108 = vmatpush1.bf16.msra.mxu0 0
    %109 = vmatprep.subr.bf16.mxu0 0
    %110 = vmatpush1.bf16.msra.mxu0 0
    %111 = vmatprep.subr.bf16.mxu0 0
    %112 = vmatpush1.bf16.msra.mxu0 0
    %113 = vmatprep.subr.bf16.mxu0 0
    %114 = vmatpush1.bf16.msra.mxu0 0
    %115 = vmatprep.subr.bf16.mxu0 0
    %116 = vmatpush1.bf16.msra.mxu0 0
    %117 = vmatprep.subr.bf16.mxu0 0
    %118 = vmatpush1.bf16.msra.mxu0 0
    %119 = vmatprep.subr.bf16.mxu0 0
    %120 = vmatpush1.bf16.msra.mxu0 0
    %121 = vmatprep.subr.bf16.mxu0 0
    %122 = vmatpush1.bf16.msra.mxu0 0
    %123 = vmatprep.subr.bf16.mxu0 0
    %124 = vmatpush1.bf16.msra.mxu0 0
    %125 = vmatprep.mubr.bf16.mxu0 0
    %126 = vmatmul.mubr.bf16.gmra.mrb[0].mxu0 %v91
    %v127 = vpop.f32.mrb[0].mxu0
    %v128 = vadd.f32 %v75, %v127
    %v129 = vpop.f32.mrb[0].mxu0
    %v130 = vpop.f32.mrb[0].mxu0
    %v131 = vadd.f32 %v75, %v130
    %v132 = vpop.f32.mrb[0].mxu0
    %133 = vdwg.mxu0
    %v134 = vmax.f32 %v128, 0.0
    %v135 = vmax.f32 %v131, 0.0
    %v136 = vpack.c.bf16 %v135, %v134
    %v137 = vld [vmem:[#allocation7] sm:$0xf]
    %v138 = vld [vmem:[#allocation7 + $0x4] sm:$0xf]
    %v139 = vld [vmem:[#allocation7 + $0x8] sm:$0xf]
    %v140 = vld [vmem:[#allocation7 + $0xc] sm:$0xf]
    %v141 = vld [vmem:[#allocation7 + $0x10] sm:$0xf]
    %v142 = vld [vmem:[#allocation7 + $0x14] sm:$0xf]
    %v143 = vld [vmem:[#allocation7 + $0x18] sm:$0xf]
    %v144 = vld [vmem:[#allocation7 + $0x1c] sm:$0xf]
    %v145 = vld [vmem:[#allocation7 + $0x20] sm:$0xf]
    %v146 = vld [vmem:[#allocation7 + $0x24] sm:$0xf]
    %v147 = vld [vmem:[#allocation7 + $0x28] sm:$0xf]
    %v148 = vld [vmem:[#allocation7 + $0x2c] sm:$0xf]
    %v149 = vld [vmem:[#allocation7 + $0x30] sm:$0xf]
    %v150 = vld [vmem:[#allocation7 + $0x34] sm:$0xf]
    %v151 = vld [vmem:[#allocation7 + $0x38] sm:$0xf]
    %v152 = vld [vmem:[#allocation7 + $0x3c] sm:$0xf]
    %v153 = vld [vmem:[%s4] sm:$0x1]
    %v155 = vlaneseq
    %v156 = vshrl.u32 %v155, 7
    %v157 = vsub.s32 0, %v156
    %v158 = vrot.slane %v153, %v157
    %v176 = vunpack.c.l.b16 %v137
    %v177 = vunpack.c.l.b16 %v138
    %v178 = vunpack.c.l.b16 %v139
    %v179 = vunpack.c.l.b16 %v140
    %v180 = vunpack.c.l.b16 %v141
    %v181 = vunpack.c.l.b16 %v142
    %v182 = vunpack.c.l.b16 %v143
    %v183 = vunpack.c.l.b16 %v144
    %v184 = vunpack.c.l.b16 %v145
    %v185 = vunpack.c.l.b16 %v146
    %v186 = vunpack.c.l.b16 %v147
    %v187 = vunpack.c.l.b16 %v148
    %v188 = vunpack.c.l.b16 %v149
    %v189 = vunpack.c.l.b16 %v150
    %v190 = vunpack.c.l.b16 %v151
    %v191 = vunpack.c.l.b16 %v152
    %v192 = vpack.c.b16 %v177, %v176
    %v193 = vpack.c.b16 %v179, %v178
    %v194 = vpack.c.b16 %v181, %v180
    %v195 = vpack.c.b16 %v183, %v182
    %v196 = vpack.c.b16 %v185, %v184
    %v197 = vpack.c.b16 %v187, %v186
    %v198 = vpack.c.b16 %v189, %v188
    %v199 = vpack.c.b16 %v191, %v190
    %208 = vmatprep.subr.bf16.mxu0 0
    %209 = vmatpush1.bf16.msra.mxu0 %v192
    %210 = vmatprep.subr.bf16.mxu0 0
    %211 = vmatpush1.bf16.msra.mxu0 %v193
    %212 = vmatprep.subr.bf16.mxu0 0
    %213 = vmatpush1.bf16.msra.mxu0 %v194
    %214 = vmatprep.subr.bf16.mxu0 0
    %215 = vmatpush1.bf16.msra.mxu0 %v195
    %216 = vmatprep.subr.bf16.mxu0 0
    %217 = vmatpush1.bf16.msra.mxu0 %v196
    %218 = vmatprep.subr.bf16.mxu0 0
    %219 = vmatpush1.bf16.msra.mxu0 %v197
    %220 = vmatprep.subr.bf16.mxu0 0
    %221 = vmatpush1.bf16.msra.mxu0 %v198
    %222 = vmatprep.subr.bf16.mxu0 0
    %223 = vmatpush1.bf16.msra.mxu0 %v199
    %224 = vmatprep.subr.bf16.mxu0 0
    %225 = vmatpush1.bf16.msra.mxu0 0
    %226 = vmatprep.subr.bf16.mxu0 0
    %227 = vmatpush1.bf16.msra.mxu0 0
    %228 = vmatprep.subr.bf16.mxu0 0
    %229 = vmatpush1.bf16.msra.mxu0 0
    %230 = vmatprep.subr.bf16.mxu0 0
    %231 = vmatpush1.bf16.msra.mxu0 0
    %232 = vmatprep.subr.bf16.mxu0 0
    %233 = vmatpush1.bf16.msra.mxu0 0
    %234 = vmatprep.subr.bf16.mxu0 0
    %235 = vmatpush1.bf16.msra.mxu0 0
    %236 = vmatprep.subr.bf16.mxu0 0
    %237 = vmatpush1.bf16.msra.mxu0 0
    %238 = vmatprep.subr.bf16.mxu0 0
    %239 = vmatpush1.bf16.msra.mxu0 0
    %240 = vmatprep.mubr.bf16.mxu0 0
    %241 = vmatmul.mubr.bf16.gmra.mrb[0].mxu0 %v136
    %v242 = vpop.f32.mrb[0].mxu0
    %v243 = vadd.f32 %v158, %v242
    %v244 = vpop.f32.mrb[0].mxu0
    %v245 = vpop.f32.mrb[0].mxu0
    %v246 = vadd.f32 %v158, %v245
    %v247 = vpop.f32.mrb[0].mxu0
    %248 = vdwg.mxu0
    %v249 = vmul.f32 %v243, 0.5
    %v250 = vmul.f32 %v246, 0.5
    %v251 = vtanh.pop %v249
    %v252 = vtanh.pop %v250
    %v253 = vmul.f32 %v251, 0.5
    %v254 = vmul.f32 %v252, 0.5
    %v255 = vadd.f32 %v253, 0.5
    %v256 = vadd.f32 %v254, 0.5
    %v257 = vpack.c.bf16 %v256, %v255
    %v259 = vunpack.c.l.b16 %v257
    %v260 = vunpack.c.h.b16 %v257
    %v261 = vpack.c.b16 %v259, %v259
    %v262 = vpack.c.b16 %v260, %v260
    %265 = vst [vmem:[#allocation8] sm:$0xf] %v261
    %266 = vst [vmem:[#allocation8 + $0x4] sm:$0xf] %v262
    // Predicated region
    $region34: #{tpu_custom_call.1} parent=1 // pred_check
      _
    $region35: #{tpu_custom_call.1} parent=1 // pred_check_branch
      %268 = sbr.rel (0) target = $region37
    $region36: #{tpu_custom_call.1} parent=1 // pred_region
      %s270 = ssub.s32 128, 128
      %271 = vsyncadd [#allocation4], %s270
      %s272 = sshll.u32 [#allocation8], 4
      %s273 = int_to_ptr.vmem [resolvable:$true] %s272
      %278 = dma.vmem_to_hbm [thread:$0]  %s273, 128, %s5, [#allocation4], 64, 64, 4
    $region37: #{tpu_custom_call.1} parent=1 // pred_fallthru
      _
    // Predicated region
    $region38: #{tpu_custom_call.1} parent=1 // pred_check
      _
    $region39: #{tpu_custom_call.1} parent=1 // pred_check_branch
      %280 = sbr.rel (0) target = $region41
    $region40: #{tpu_custom_call.1} parent=1 // pred_region
      %281 = dma.done [#allocation4], 128
    $region41: #{tpu_custom_call.1} parent=1 // pred_fallthru
      _
    %282 = vsyncpa [#allocation3], 1
    %283 = vsyncpa [#allocation6], 1
    %284 = vsyncpa [#allocation4], 1

</llo_original>
